<compile_context>
chip_gen: v6e
topology: v6e:2x2x1
jax: 0.10.0
libtpu: 0.0.40
codegen_flags: <defaults>
</compile_context>

<pallas_src>
import jax
import jax.numpy as jnp
from jax.experimental import pallas as pl
from jax.experimental.pallas import tpu as pltpu


def _self_attn_kernel(h_ref, mask_ref, params_ref, out_ref):
    # h_ref:      (B, N, D)    full batch in one step (N padded to 8k)
    # mask_ref:   (B, N, 1)    int32: 1 = keep, 0 = masked
    # params_ref: (D + 2, da)  rows [0:D] = a.weight^T, row D = a.bias,
    #                          row D+1 = b.weight (as a row, no bias)
    # out_ref:    (B, D)
    B, N, D = h_ref.shape

    h = h_ref[...]                                        # (B, N, D)
    # Free relabel: wrapper guarantees N % 8 == 0, so this never crosses
    # (8, 128) tile padding (no hidden relayout copy).
    h2 = h.reshape(B * N, D)

    # Static slices of the packed parameter slab (zero-cost views).
    wa = params_ref[0:D, :]                               # (D, da)
    ba = params_ref[D:D + 1, :]                           # (1, da)
    wb = params_ref[D + 1:D + 2, :]                       # (1, da)

    # f = tanh(h @ Wa^T + ba): one (B*N, D) x (D, da) MXU matmul, f32 acc.
    f = jnp.tanh(jnp.dot(h2, wa, preferred_element_type=jnp.float32) + ba)

    # s = f @ Wb^T (width-1 MXU output) rewritten as VPU mul + lane reduce.
    # (16,1) -> (2,8,1) is a pure leading-dim regroup (per-tile shape unchanged).
    s = jnp.sum(f * wb, axis=-1, keepdims=True).reshape(B, N, 1)     # (B, N, 1)

    # In-kernel mask: a single compare + select on the VPU (free filler slot),
    # replacing the wrapper-side precomputed f32 additive bias.
    s = jnp.where(mask_ref[...] != 0, s, jnp.float32(-1e9))          # (B, N, 1)

    # Numerically-stable softmax over N (sublane axis); attention stays in the
    # (B, N, 1) layout so the weighted combine below is a size-1 lane broadcast
    # (no cross-layout relayouts at this size).
    s_max = jnp.max(s, axis=1, keepdims=True)                        # (B, 1, 1)
    p = jnp.exp(s - s_max)                                           # (B, N, 1)
    denom = jnp.sum(p, axis=1, keepdims=True)                        # (B, 1, 1)
    # EUP fast reciprocal: the divide moves off the VALU slot.
    attn = p * pl.reciprocal(denom, approx=True)                     # (B, N, 1)

    # h_bar = sum_n h[:, n, :] * attn[:, n] — one lane-dense (B, D) store.
    out_ref[...] = jnp.sum(h * attn, axis=1)                         # (B, D)


def self_attention_layer(h, mask, wa_t, ba, wb_t):
    """h: (B, N, D) f32, mask: (B, N) bool, wa_t: (D, da), ba: (da,), wb_t: (da, 1)."""
    B, N, D = h.shape
    da = wa_t.shape[1]

    # Guard the in-kernel (B*N, D) flatten: pad N up to a sublane multiple so
    # the reshape stays a free relabel.  Pad rows get mask=False -> attn ~= 0.
    n_pad = (-N) % 8
    if n_pad:
        h = jnp.pad(h, ((0, 0), (0, n_pad), (0, 0)))
        mask = jnp.pad(mask, ((0, 0), (0, n_pad)))       # pads with False
        N = N + n_pad

    # Pack the three tiny parameter tensors into one slab: a single operand
    # DMA instead of three; the kernel slices it statically (free).
    params = jnp.concatenate(
        [wa_t, ba.reshape(1, da), wb_t.reshape(1, da)], axis=0
    ).astype(jnp.float32)                                # (D + 2, da)

    # Raw mask as a small int32 operand; the compare/select happens in-kernel.
    mask_i32 = mask.astype(jnp.int32)[..., None]         # (B, N, 1)

    cost = pl.CostEstimate(
        flops=2 * B * N * D * da + 4 * B * N * da + 8 * B * N + 3 * B * N * D,
        transcendentals=B * N * da + B * N + B,          # tanh, exp, reciprocal
        bytes_accessed=4 * (B * N * D + B * N + (D + 2) * da + B * D),
    )

    vmem = pltpu.MemorySpace.VMEM
    out = pl.pallas_call(
        _self_attn_kernel,
        out_shape=jax.ShapeDtypeStruct((B, D), jnp.float32),
        in_specs=[
            pl.BlockSpec(memory_space=vmem),             # h      (whole array)
            pl.BlockSpec(memory_space=vmem),             # mask
            pl.BlockSpec(memory_space=vmem),             # packed params
        ],
        out_specs=pl.BlockSpec(memory_space=vmem),
        cost_estimate=cost,
    )(h.astype(jnp.float32), mask_i32, params)
    return out


def _reference(h, mask, wa_t, ba, wb_t):
    f = jnp.tanh(h @ wa_t + ba)
    s = (f @ wb_t)[..., 0]
    s = jnp.where(mask, s, -1e9)
    attn = jax.nn.softmax(s, axis=-1)
    return jnp.sum(h * attn[..., None], axis=1)


if __name__ == "__main__":
    # Module hyperparams: SelfAttentionLayer(dim) -> input feature size 2*dim, da = dim.
    dim = 16
    D = 2 * dim      # 32  (input / output feature dim)
    da = dim         # 16
    B, N = 2, 8      # batch, sequence length

    key = jax.random.PRNGKey(0)
    k_h, k_wa, k_ba, k_wb, k_m = jax.random.split(key, 5)

    h = jax.random.normal(k_h, (B, N, D), dtype=jnp.float32)
    # Deterministic parameter init (Linear(2d->d, bias=True), Linear(d->1, bias=False)).
    wa_t = jax.random.normal(k_wa, (D, da), dtype=jnp.float32) * 0.1   # a.weight^T
    ba = jax.random.normal(k_ba, (da,), dtype=jnp.float32) * 0.1       # a.bias
    wb_t = jax.random.normal(k_wb, (da, 1), dtype=jnp.float32) * 0.1   # b.weight^T
    # Boolean mask with at least one valid position per row.
    mask = jax.random.uniform(k_m, (B, N)) > 0.3
    mask = mask.at[:, 0].set(True)

    out = jax.block_until_ready(self_attention_layer(h, mask, wa_t, ba, wb_t))
    ref = _reference(h, mask, wa_t, ba, wb_t)

    assert out.shape == (B, D)
    # Tolerance relaxed to 1e-3 solely to cover the EUP fast-reciprocal path
    # (approx=True) requested by the perf review; with approx=False this kernel
    # matches the reference at 1e-5.
    assert jnp.allclose(out, ref, atol=1e-3, rtol=1e-3), "mismatch vs reference"

    print("KERNEL_OK")
</pallas_src>

<mosaic_0001>
module attributes {stable_mosaic.version = 11 : i64} {
  func.func @_self_attn_kernel(%arg0: memref<2x8x32xf32, #tpu.memory_space<vmem>>, %arg1: memref<2x8x1xi32, #tpu.memory_space<vmem>>, %arg2: memref<34x16xf32, #tpu.memory_space<vmem>>, %arg3: memref<2x32xf32, #tpu.memory_space<vmem>>) attributes {dimension_semantics = [], scalar_prefetch = 0 : i64, scratch_operands = 0 : i64, tpu.core_type = #tpu.core_type<tc>} {
    %c0 = arith.constant 0 : index
    %c0_0 = arith.constant 0 : index
    %c0_1 = arith.constant 0 : index
    %0 = vector.load %arg0[%c0, %c0_0, %c0_1] : memref<2x8x32xf32, #tpu.memory_space<vmem>>, vector<2x8x32xf32>
    %1 = vector.shape_cast %0 : vector<2x8x32xf32> to vector<16x32xf32>
    %c0_2 = arith.constant 0 : index
    %c0_3 = arith.constant 0 : index
    %2 = vector.load %arg2[%c0_2, %c0_3] : memref<34x16xf32, #tpu.memory_space<vmem>>, vector<32x16xf32>
    %c32 = arith.constant 32 : index
    %c0_4 = arith.constant 0 : index
    %3 = vector.load %arg2[%c32, %c0_4] : memref<34x16xf32, #tpu.memory_space<vmem>>, vector<1x16xf32>
    %c33 = arith.constant 33 : index
    %c0_5 = arith.constant 0 : index
    %4 = vector.load %arg2[%c33, %c0_5] : memref<34x16xf32, #tpu.memory_space<vmem>>, vector<1x16xf32>
    %cst = arith.constant dense<0.000000e+00> : vector<16x16xf32>
    %5 = tpu.matmul %1, %2, %cst {dimension_numbers = #tpu.dot_dimension_numbers<[1], [0], [0], [1], [0, 0, 1, 1], [], []>} : vector<16x32xf32>, vector<32x16xf32>, vector<16x16xf32> -> vector<16x16xf32>
    %6 = vector.broadcast %3 : vector<1x16xf32> to vector<16x16xf32>
    %7 = arith.addf %5, %6 : vector<16x16xf32>
    %8 = math.tanh %7 : vector<16x16xf32>
    %9 = vector.broadcast %4 : vector<1x16xf32> to vector<16x16xf32>
    %10 = arith.mulf %8, %9 : vector<16x16xf32>
    %cst_6 = arith.constant dense<0.000000e+00> : vector<16xf32>
    %11 = vector.multi_reduction <add>, %10, %cst_6 [1] : vector<16x16xf32> to vector<16xf32>
    %12 = vector.shape_cast %11 : vector<16xf32> to vector<16x1xf32>
    %13 = vector.shape_cast %12 : vector<16x1xf32> to vector<2x8x1xf32>
    %c0_7 = arith.constant 0 : index
    %c0_8 = arith.constant 0 : index
    %c0_9 = arith.constant 0 : index
    %14 = vector.load %arg1[%c0_7, %c0_8, %c0_9] : memref<2x8x1xi32, #tpu.memory_space<vmem>>, vector<2x8x1xi32>
    %c0_i32 = arith.constant 0 : i32
    %15 = vector.broadcast %c0_i32 : i32 to vector<2x8x1xi32>
    %16 = arith.cmpi ne, %14, %15 : vector<2x8x1xi32>
    %cst_10 = arith.constant -1.000000e+09 : f32
    %17 = vector.broadcast %cst_10 : f32 to vector<2x8x1xf32>
    %18 = arith.select %16, %13, %17 : vector<2x8x1xi1>, vector<2x8x1xf32>
    %cst_11 = arith.constant dense<0xFF800000> : vector<2x1xf32>
    %19 = vector.multi_reduction <maximumf>, %18, %cst_11 [1] : vector<2x8x1xf32> to vector<2x1xf32>
    %20 = vector.shape_cast %19 : vector<2x1xf32> to vector<2x1x1xf32>
    %21 = vector.broadcast %20 : vector<2x1x1xf32> to vector<2x8x1xf32>
    %22 = arith.subf %18, %21 : vector<2x8x1xf32>
    %23 = math.exp %22 : vector<2x8x1xf32>
    %cst_12 = arith.constant dense<0.000000e+00> : vector<2x1xf32>
    %24 = vector.multi_reduction <add>, %23, %cst_12 [1] : vector<2x8x1xf32> to vector<2x1xf32>
    %25 = vector.shape_cast %24 : vector<2x1xf32> to vector<2x1x1xf32>
    %26 = tpu.reciprocal %25 {approx = true} : vector<2x1x1xf32> -> vector<2x1x1xf32>
    %27 = vector.broadcast %26 : vector<2x1x1xf32> to vector<2x8x1xf32>
    %28 = arith.mulf %23, %27 : vector<2x8x1xf32>
    %29 = vector.broadcast %28 : vector<2x8x1xf32> to vector<2x8x32xf32>
    %30 = arith.mulf %0, %29 : vector<2x8x32xf32>
    %cst_13 = arith.constant dense<0.000000e+00> : vector<2x32xf32>
    %31 = vector.multi_reduction <add>, %30, %cst_13 [1] : vector<2x8x32xf32> to vector<2x32xf32>
    %c0_14 = arith.constant 0 : index
    %c0_15 = arith.constant 0 : index
    %32 = vector.load %arg3[%c0_14, %c0_15] : memref<2x32xf32, #tpu.memory_space<vmem>>, vector<2x32xf32>
    tpu.vector_store %arg3[%c0_14, %c0_15], %31 {strides = array<i32>} : memref<2x32xf32, #tpu.memory_space<vmem>>, vector<2x32xf32>,
    return
  }
}

</mosaic_0001>

<llo_original>
// kernel: tpu_custom_call.1
$region0: #{tpu_custom_call.1}
  #allocation0 [shape = 'u32[]', space=smem, size = 0x4, offset = 0x4, fixed_abs, tag = 'smem constant byte address 0x4 - core index']
  #allocation1 [shape = 'u32[144,128]{1,0:T(1,128)}', space=vmem, size = 0x12000, scoped, tag = 'internal scratch']
  %s0 = inlined_call_operand.vmem [shape: f32[2,8,32], index: 0, kind: input, shape index: {}]
  %s1 = inlined_call_operand.vmem [shape: s32[2,8,1], index: 1, kind: input, shape index: {}]
  %s2 = inlined_call_operand.vmem [shape: f32[34,16], index: 2, kind: input, shape index: {}]
  %s3 = inlined_call_operand.hbm [shape: f32[2,32], index: 3, kind: output, shape index: {}]
  %s4 = sld [smem:[#allocation0]]
  $region22: #{tpu_custom_call.1} parent=0
    _
  %s6 = ssub.s32 1, %s4
  %s7 = scalar_select 0, %s6, %s4
  $region1: #{tpu_custom_call.1} parent=0
    #allocation2 [shape = 'u8[1024]{0}', space=vmem, size = 0x400, scoped, tag = 'output window, operand 0, single buffered']
    #allocation3 [shape = 's32[1]{0}', space=sflag, size = 0x4, scoped, tag = 'scoped memory for tpu_custom_call.1']
    %8 = vsyncpa [#allocation3], 0
    // Predicated region
    $region2: #{tpu_custom_call.1} parent=1 // pred_check
      _
    $region3: #{tpu_custom_call.1} parent=1 // pred_check_branch
      %10 = sbr.rel (0) target = $region5
    $region4: #{tpu_custom_call.1} parent=1 // pred_region
      _
    $region5: #{tpu_custom_call.1} parent=1 // pred_fallthru
      _
    // Predicated region
    $region6: #{tpu_custom_call.1} parent=1 // pred_check
      _
    $region7: #{tpu_custom_call.1} parent=1 // pred_check_branch
      %12 = sbr.rel (0) target = $region9
    $region8: #{tpu_custom_call.1} parent=1 // pred_region
      _
    $region9: #{tpu_custom_call.1} parent=1 // pred_fallthru
      _
    // Predicated region
    $region10: #{tpu_custom_call.1} parent=1 // pred_check
      _
    $region11: #{tpu_custom_call.1} parent=1 // pred_check_branch
      %14 = sbr.rel (0) target = $region13
    $region12: #{tpu_custom_call.1} parent=1 // pred_region
      _
    $region13: #{tpu_custom_call.1} parent=1 // pred_fallthru
      _
    %v15 = vld [vmem:[%s0] sm:$0xff]
    %v16 = vld [vmem:[%s0 + $0x8] sm:$0xff]
    %v17 = vld [vmem:[%s2] sm:$0xff]
    %v18 = vld [vmem:[%s2 + $0x8] sm:$0xff]
    %v19 = vld [vmem:[%s2 + $0x10] sm:$0xff]
    %v20 = vld [vmem:[%s2 + $0x18] sm:$0xff]
    %v21 = vld [vmem:[%s2 + $0x20] sm:$0x1]
    %v22 = vld [vmem:[%s2 + $0x21] sm:$0x1]
    %v23 = vlaneseq
    %v24 = vshrl.u32 %v23, 7
    %v25 = vsub.s32 0, %v24
    %v26 = vrot.slane %v21, %v25
    %vm27 = vcmask 261120
    %v29 = vsel %vm27, %v15, 0
    %v32 = vsel %vm27, %v16, 0
    %34 = vmatprep.subr.mxu0 0.0
    %35 = vmatpush1.msra.mxu0 0.0
    %36 = vmatprep.subr.mxu0 0.0
    %37 = vmatpush1.msra.mxu0 0.0
    %38 = vmatprep.subr.mxu0 0.0
    %39 = vmatpush1.msra.mxu0 0.0
    %40 = vmatprep.subr.mxu0 0.0
    %41 = vmatpush1.msra.mxu0 0.0
    %42 = vmatprep.subr.mxu0 0.0
    %43 = vmatpush1.msra.mxu0 0.0
    %44 = vmatprep.subr.mxu0 0.0
    %45 = vmatpush1.msra.mxu0 0.0
    %46 = vmatprep.subr.mxu0 0.0
    %47 = vmatpush1.msra.mxu0 0.0
    %48 = vmatprep.subr.mxu0 0.0
    %49 = vmatpush1.msra.mxu0 0.0
    %50 = vmatprep.subr.mxu0 0.0
    %51 = vmatpush1.msra.mxu0 0.0
    %52 = vmatprep.subr.mxu0 0.0
    %53 = vmatpush1.msra.mxu0 0.0
    %54 = vmatprep.subr.mxu0 0.0
    %55 = vmatpush1.msra.mxu0 0.0
    %56 = vmatprep.subr.mxu0 0.0
    %57 = vmatpush1.msra.mxu0 0.0
    %58 = vmatprep.subr.mxu0 0.0
    %59 = vmatpush1.msra.mxu0 %v20
    %60 = vmatprep.subr.mxu0 0.0
    %61 = vmatpush1.msra.mxu0 %v19
    %62 = vmatprep.subr.mxu0 0.0
    %63 = vmatpush1.msra.mxu0 %v18
    %64 = vmatprep.subr.mxu0 0.0
    %65 = vmatpush1.msra.mxu0 %v17
    %66 = vmatprep.subr.mxu0 0.0
    %67 = vmatpush2.msra.mxu0 0.0
    %68 = vmatprep.subr.mxu0 0.0
    %69 = vmatpush2.msra.mxu0 0.0
    %70 = vmatprep.subr.mxu0 0.0
    %71 = vmatpush2.msra.mxu0 0.0
    %72 = vmatprep.subr.mxu0 0.0
    %73 = vmatpush2.msra.mxu0 0.0
    %74 = vmatprep.subr.mxu0 0.0
    %75 = vmatpush2.msra.mxu0 0.0
    %76 = vmatprep.subr.mxu0 0.0
    %77 = vmatpush2.msra.mxu0 0.0
    %78 = vmatprep.subr.mxu0 0.0
    %79 = vmatpush2.msra.mxu0 0.0
    %80 = vmatprep.subr.mxu0 0.0
    %81 = vmatpush2.msra.mxu0 0.0
    %82 = vmatprep.subr.mxu0 0.0
    %83 = vmatpush2.msra.mxu0 0.0
    %84 = vmatprep.subr.mxu0 0.0
    %85 = vmatpush2.msra.mxu0 0.0
    %86 = vmatprep.subr.mxu0 0.0
    %87 = vmatpush2.msra.mxu0 0.0
    %88 = vmatprep.subr.mxu0 0.0
    %89 = vmatpush2.msra.mxu0 0.0
    %90 = vmatprep.subr.mxu0 0.0
    %91 = vmatpush2.msra.mxu0 0.0
    %92 = vmatprep.subr.mxu0 0.0
    %93 = vmatpush2.msra.mxu0 0.0
    %94 = vmatprep.subr.mxu0 0.0
    %95 = vmatpush2.msra.mxu0 0.0
    %96 = vmatprep.subr.mxu0 0.0
    %97 = vmatpush2.msra.mxu0 0.0
    %98 = vmatprep.mubr.f32.mxu0 0.0
    %99 = vmatmul.mubr.f32.gmra.mxu0 %v29
    %v100 = vpop.f32.mrf.mxu0
    %v101 = vadd.f32 %v26, %v100
    %v102 = vpop.f32.mrf.mxu0
    %103 = vmatprep.mubr.f32.mxu0 0.0
    %104 = vmatmul.mubr.f32.gmra.mxu0 %v32
    %v105 = vpop.f32.mrf.mxu0
    %v106 = vadd.f32 %v26, %v105
    %v107 = vpop.f32.mrf.mxu0
    %108 = vdwg.mxu0
    %v109 = vtanh.pop %v101
    %v110 = vtanh.pop %v106
    %v111 = vlaneseq
    %v112 = vshrl.u32 %v111, 7
    %v113 = vsub.s32 0, %v112
    %v114 = vrot.slane %v22, %v113
    %v115 = vmul.f32 %v109, %v114
    %v116 = vmul.f32 %v110, %v114
    %vm117 = vcmask 130048
    %v118 = vsel %vm117, %v115, 0.0
    %119 = vadd.xlane.f32.xlu0 %v118
    %v120 = vpop.xlane.xlu0 %119
    %v121 = vsel %vm117, %v116, 0.0
    %122 = vadd.xlane.f32.xlu0 %v121
    %v123 = vpop.xlane.xlu0 %122
    %v124 = vld [vmem:[%s1] sm:$0xff]
    %v125 = vld [vmem:[%s1 + $0x8] sm:$0xff]
    %vm126 = vcmp.ne.s32.totalorder %v124, 0
    %vm127 = vcmp.ne.s32.totalorder %v125, 0
    %v128 = vsel %vm126, %v120, -1e+09
    %v129 = vsel %vm127, %v123, -1e+09
    %vm130 = vcmask 7168
    %v131 = vsel %vm130, %v128, -inf
    %v132 = vrot.slane %v131, 4
    %v133 = vmax.f32 %v131, %v132
    %v134 = vrot.slane %v133, 2
    %v135 = vmax.f32 %v133, %v134
    %v136 = vrot.slane %v135, 1
    %v137 = vmax.f32 %v135, %v136
    %v138 = vsel %vm130, %v129, -inf
    %v139 = vrot.slane %v138, 4
    %v140 = vmax.f32 %v138, %v139
    %v141 = vrot.slane %v140, 2
    %v142 = vmax.f32 %v140, %v141
    %v143 = vrot.slane %v142, 1
    %v144 = vmax.f32 %v142, %v143
    %v145 = vsub.f32 %v128, %v137
    %v146 = vsub.f32 %v129, %v144
    %v147 = vmul.f32 %v145, 1.442695
    %v148 = vpow.pop %v147
    %v149 = vmul.f32 %v146, 1.442695
    %v150 = vpow.pop %v149
    %v151 = vsel %vm130, %v148, 0.0
    %v152 = vrot.slane %v151, 4
    %v153 = vadd.f32 %v151, %v152
    %v154 = vrot.slane %v153, 2
    %v155 = vadd.f32 %v153, %v154
    %v156 = vrot.slane %v155, 1
    %v157 = vadd.f32 %v155, %v156
    %v158 = vsel %vm130, %v150, 0.0
    %v159 = vrot.slane %v158, 4
    %v160 = vadd.f32 %v158, %v159
    %v161 = vrot.slane %v160, 2
    %v162 = vadd.f32 %v160, %v161
    %v163 = vrot.slane %v162, 1
    %v164 = vadd.f32 %v162, %v163
    %v165 = vrcp.pop %v157
    %v166 = vrcp.pop %v164
    %v167 = vmul.f32 %v148, %v165
    %v168 = vmul.f32 %v150, %v166
    %170 = vset.pattern.permute.xlu0 0
    %171 = vperm.xlu0 %170, %v167
    %v172 = vpop.permute.xlu0 %171
    %175 = vset.pattern.permute.xlu0 0
    %176 = vperm.xlu0 %175, %v168
    %v177 = vpop.permute.xlu0 %176
    %v179 = vmul.f32 %v15, %v172
    %v180 = vmul.f32 %v16, %v177
    %v181 = vsel %vm27, %v179, 0.0
    %v182 = vrot.slane %v181, 4
    %v183 = vadd.f32 %v181, %v182
    %v184 = vrot.slane %v183, 2
    %v185 = vadd.f32 %v183, %v184
    %v186 = vrot.slane %v185, 1
    %v187 = vadd.f32 %v185, %v186
    %v188 = vsel %vm27, %v180, 0.0
    %v189 = vrot.slane %v188, 4
    %v190 = vadd.f32 %v188, %v189
    %v191 = vrot.slane %v190, 2
    %v192 = vadd.f32 %v190, %v191
    %v193 = vrot.slane %v192, 1
    %v194 = vadd.f32 %v192, %v193
    %vm197 = vcmask 1041409
    %v198 = vsel %vm197, %v194, %v187
    %vm200 = vcmask 254976
    %201 = vst.msk [vmem:[#allocation2] sm:$0x3] %vm200, %v198
    // Predicated region
    $region14: #{tpu_custom_call.1} parent=1 // pred_check
      _
    $region15: #{tpu_custom_call.1} parent=1 // pred_check_branch
      %203 = sbr.rel (0) target = $region17
    $region16: #{tpu_custom_call.1} parent=1 // pred_region
      %s205 = ssub.s32 32, 32
      %206 = vsyncadd [#allocation3], %s205
      %s208 = sshll.u32 [#allocation2], 4
      %s209 = int_to_ptr.vmem [resolvable:$true] %s208
      %211 = dma.vmem_to_hbm [thread:$0]  %s209, 32, %s3, [#allocation3]
    $region17: #{tpu_custom_call.1} parent=1 // pred_fallthru
      _
    // Predicated region
    $region18: #{tpu_custom_call.1} parent=1 // pred_check
      _
    $region19: #{tpu_custom_call.1} parent=1 // pred_check_branch
      %213 = sbr.rel (0) target = $region21
    $region20: #{tpu_custom_call.1} parent=1 // pred_region
      %214 = dma.done [#allocation3], 32
    $region21: #{tpu_custom_call.1} parent=1 // pred_fallthru
      _
    %215 = vsyncpa [#allocation3], 1

</llo_original>
